<compile_context>
chip_gen: v7x
topology: tpu7x:2x2x1
jax: 0.10.0
libtpu: 0.0.40
codegen_flags: <defaults>
</compile_context>

<pallas_src>
import math

import jax
import jax.numpy as jnp
from jax.experimental import pallas as pl
from jax.experimental.pallas import tpu as pltpu


# ------------------------------ Pallas kernel --------------------------------

def _film_kernel(g_ref, b_ref, x_ref, o_ref):
    """Pure streaming FiLM modulation: out = x * gamma + beta.

    g_ref, b_ref : [1, Cb, 1, L]   per-batch gamma/beta, lane-tiled to width L
                                   (constant over the time-tile grid axis;
                                   broadcast over the sublane/time axis here)
    x_ref, o_ref : [1, Cb, Sb, L]  lane-dense x / out tile (lane = t*F + f)
    """
    o_ref[...] = (x_ref[...] * g_ref[...] + b_ref[...]).astype(o_ref.dtype)


# ------------------------------- Tiling helpers -------------------------------

def _lane_width(F, T, max_lanes=4096):
    """Lane width L for the (T, F) -> (S, L) collapse.

    Prefers L = lcm(F, 128) so the last block dim is a multiple of 128
    (unmasked vst -- the biggest measured store-path lever).  Falls back to the
    natural L = F layout (correct, possibly masked stores) when T is ragged or
    lcm(F, 128) is unreasonably wide.
    """
    if F % 128 == 0:
        return F
    lcm = (F * 128) // math.gcd(F, 128)
    if lcm <= max_lanes and (T * F) % lcm == 0:
        return lcm
    # TODO(synk): pad T to a multiple of lcm // F instead of using the
    # masked-store fallback for ragged T.
    return F


def _pick_tiles(C, S, L, itemsize, budget_bytes):
    """Largest (c_blk, s_blk) whose x/out block fits `budget_bytes`.

    `budget_bytes` is per block; the caller accounts for the pipelining factor
    (double-buffered input AND output ~= 4x) when setting vmem_limit_bytes.
    Tiles C as well as the sublane axis, and raises -- rather than silently
    returning an oversized block -- if nothing legal fits.
    """
    def divisors_desc(n):
        return [d for d in range(n, 0, -1) if n % d == 0]

    # Legal sublane block sizes: a multiple of 8 or the full extent.
    s_cands = [d for d in divisors_desc(S) if d % 8 == 0 or d == S]
    for c_blk in divisors_desc(C):
        for s_blk in s_cands:
            if c_blk * s_blk * L * itemsize <= budget_bytes:
                return c_blk, s_blk
    raise ValueError(
        f"FiLM tile does not fit the VMEM block budget: C={C}, S={S}, L={L}, "
        f"itemsize={itemsize}, budget_bytes={budget_bytes}")


def _vmem_limit_bytes(c_blk, s_blk, L, itemsize):
    x_blk = c_blk * s_blk * L * itemsize
    gb_blk = c_blk * L * 4
    # Double-buffered x input + output, double-buffered gamma/beta (KB-scale),
    # plus headroom for compiler-internal scratch.
    need = 4 * x_blk + 4 * gb_blk + (4 << 20)
    # Cap at 32 MiB: at/below the default scoped limit on v6e/v7x and far under
    # physical VMEM on v5e/v6e (128 MiB) and v7x (64 MiB).
    return int(min(max(need, 16 << 20), 32 << 20))


# -------------------------------- Wrapper -------------------------------------

def film_1d(x, cond, w_gb, b_gb, *, block_budget_bytes=4 << 20, donate_x=False):
    """FiLM1DLayer.forward.

    x    : [B, C, T, F]   (PyTorch layout)
    cond : [B, Din]
    w_gb : [Din, 2*C*F]   fused [gamma | beta] linear weight
    b_gb : [1, 2*C*F]     fused [gamma | beta] linear bias
    returns [B, C, T, F]
    """
    B, C, T, F = x.shape
    Din = cond.shape[-1]
    CF = C * F
    assert w_gb.shape == (Din, 2 * CF), w_gb.shape
    assert b_gb.shape == (1, 2 * CF), b_gb.shape

    # --- gamma/beta generation: hoisted out of the streaming grid -------------
    # Tiny [B, 2*C*F] matmul + sigmoid, done once per forward (per the perf
    # review) instead of a degenerate M=1 MXU push + sigmoid + unflatten in
    # every T-tile of the Pallas grid.
    # TODO(synk): activation assumed sigmoid (LinearBlock1D not given).
    gb = jax.nn.sigmoid(
        jnp.dot(cond, w_gb, preferred_element_type=jnp.float32) + b_gb)
    gamma = gb[:, :CF].reshape(B, C, 1, F)  # == reshape(B,C,F,-1).transpose(-1,-2)
    beta = gb[:, CF:].reshape(B, C, 1, F)

    # --- lane-dense layout -----------------------------------------------------
    # Collapse (T, F) -> (S, L): a free reshape of the contiguous trailing dims.
    # L is a multiple of 128 whenever possible (unmasked stores); gamma/beta are
    # lane-tiled ONCE here (tiny) so the kernel body is a single x * g + b with
    # a sublane broadcast -- no per-step block-sized gamma/beta intermediates.
    L = _lane_width(F, T)
    R = L // F                      # time steps folded into one lane row
    S = (T * F) // L                # sublane rows per (b, c)
    x4 = x.reshape(B, C, S, L)
    if R > 1:
        gamma = jnp.tile(gamma, (1, 1, 1, R))   # [B, C, 1, L]  (tiny)
        beta = jnp.tile(beta, (1, 1, 1, R))

    c_blk, s_blk = _pick_tiles(C, S, L, x.dtype.itemsize, block_budget_bytes)
    grid = (B, C // c_blk, S // s_blk)

    out4 = pl.pallas_call(
        _film_kernel,
        out_shape=jax.ShapeDtypeStruct((B, C, S, L), x.dtype),
        grid=grid,
        in_specs=[
            # gamma/beta: constant over the time-tile axis -> DMA'd only when
            # the (b, c) block changes; KB-scale blocks, so default buffering
            # is negligible (the large fused weight never enters this kernel).
            pl.BlockSpec((1, c_blk, 1, L), lambda b, c, s: (b, c, 0, 0)),
            pl.BlockSpec((1, c_blk, 1, L), lambda b, c, s: (b, c, 0, 0)),
            pl.BlockSpec((1, c_blk, s_blk, L), lambda b, c, s: (b, c, s, 0)),
        ],
        out_specs=pl.BlockSpec((1, c_blk, s_blk, L), lambda b, c, s: (b, c, s, 0)),
        compiler_params=pltpu.CompilerParams(
            # All grid axes are independent -> shards across both v7x
            # TensorCores; costs nothing on single-TC v5e/v6e.
            dimension_semantics=("parallel", "parallel", "parallel"),
            vmem_limit_bytes=_vmem_limit_bytes(c_blk, s_blk, L,
                                               x.dtype.itemsize)),
        input_output_aliases=({2: 0} if donate_x else {}),
    )(gamma, beta, x4)
    return out4.reshape(B, C, T, F)


# --------------------------- Pure-JAX reference --------------------------------

def film_1d_ref(x, cond, w_gb, b_gb):
    B, C, T, F = x.shape
    CF = C * F
    gb = jax.nn.sigmoid(cond @ w_gb + b_gb)        # [B, 2*C*F]
    g = gb[:, :CF].reshape(B, C, 1, F)
    bt = gb[:, CF:].reshape(B, C, 1, F)
    return x * g + bt


# ----------------------------------- Main --------------------------------------

if __name__ == "__main__":
    # input_dim=32, channels_dim=8, T=16, feature_size=16
    B, Din, C, T, F = 2, 32, 8, 16, 16

    key = jax.random.PRNGKey(0)
    kx, kc, kw, kb = jax.random.split(key, 4)
    x = jax.random.normal(kx, (B, C, T, F), jnp.float32)
    cond = jax.random.normal(kc, (B, Din), jnp.float32)
    # Fused gamma|beta parameters of the two LinearBlock1D heads.
    w_gb = jax.random.normal(kw, (Din, 2 * C * F), jnp.float32) * 0.1
    b_gb = jax.random.normal(kb, (1, 2 * C * F), jnp.float32) * 0.1

    out = jax.block_until_ready(jax.jit(film_1d)(x, cond, w_gb, b_gb))

    ref = film_1d_ref(x, cond, w_gb, b_gb)
    assert out.shape == (B, C, T, F), out.shape
    assert bool(jnp.all(jnp.isfinite(out)))
    err = float(jnp.max(jnp.abs(out - ref)))
    assert err < 1e-5, err
    print("KERNEL_OK")
</pallas_src>

<mosaic_0001>
module attributes {stable_mosaic.version = 11 : i64} {
  func.func @_film_kernel(%arg0: i32, %arg1: i32, %arg2: i32, %arg3: memref<1x8x1x128xf32, #tpu.memory_space<vmem>>, %arg4: memref<1x8x1x128xf32, #tpu.memory_space<vmem>>, %arg5: memref<1x8x2x128xf32, #tpu.memory_space<vmem>>, %arg6: memref<1x8x2x128xf32, #tpu.memory_space<vmem>>) attributes {dimension_semantics = [#tpu.dimension_semantics<parallel>, #tpu.dimension_semantics<parallel>, #tpu.dimension_semantics<parallel>], iteration_bounds = array<i64: 2, 1, 1>, scalar_prefetch = 0 : i64, scratch_operands = 0 : i64, tpu.core_type = #tpu.core_type<tc>, window_params = [{transform_indices = @transform_0, window_bounds = array<i64: 1, 8, 1, 128>}, {transform_indices = @transform_1, window_bounds = array<i64: 1, 8, 1, 128>}, {transform_indices = @transform_2, window_bounds = array<i64: 1, 8, 2, 128>}, {transform_indices = @transform_3, window_bounds = array<i64: 1, 8, 2, 128>}]} {
    %c0 = arith.constant 0 : index
    %c0_0 = arith.constant 0 : index
    %c0_1 = arith.constant 0 : index
    %c0_2 = arith.constant 0 : index
    %0 = vector.load %arg5[%c0, %c0_0, %c0_1, %c0_2] : memref<1x8x2x128xf32, #tpu.memory_space<vmem>>, vector<1x8x2x128xf32>
    %c0_3 = arith.constant 0 : index
    %c0_4 = arith.constant 0 : index
    %c0_5 = arith.constant 0 : index
    %c0_6 = arith.constant 0 : index
    %1 = vector.load %arg3[%c0_3, %c0_4, %c0_5, %c0_6] : memref<1x8x1x128xf32, #tpu.memory_space<vmem>>, vector<1x8x1x128xf32>
    %2 = vector.broadcast %1 : vector<1x8x1x128xf32> to vector<1x8x2x128xf32>
    %3 = arith.mulf %0, %2 : vector<1x8x2x128xf32>
    %c0_7 = arith.constant 0 : index
    %c0_8 = arith.constant 0 : index
    %c0_9 = arith.constant 0 : index
    %c0_10 = arith.constant 0 : index
    %4 = vector.load %arg4[%c0_7, %c0_8, %c0_9, %c0_10] : memref<1x8x1x128xf32, #tpu.memory_space<vmem>>, vector<1x8x1x128xf32>
    %5 = vector.broadcast %4 : vector<1x8x1x128xf32> to vector<1x8x2x128xf32>
    %6 = arith.addf %3, %5 : vector<1x8x2x128xf32>
    %c0_11 = arith.constant 0 : index
    %c0_12 = arith.constant 0 : index
    %c0_13 = arith.constant 0 : index
    %c0_14 = arith.constant 0 : index
    %7 = vector.load %arg6[%c0_11, %c0_12, %c0_13, %c0_14] : memref<1x8x2x128xf32, #tpu.memory_space<vmem>>, vector<1x8x2x128xf32>
    tpu.vector_store %arg6[%c0_11, %c0_12, %c0_13, %c0_14], %6 {strides = array<i32>} : memref<1x8x2x128xf32, #tpu.memory_space<vmem>>, vector<1x8x2x128xf32>,
    return
  }
  func.func @transform_0(%arg0: i32, %arg1: i32, %arg2: i32) -> (i32, i32, i32, i32) {
    %c0_i32 = arith.constant 0 : i32
    %c0_i32_0 = arith.constant 0 : i32
    %c0_i32_1 = arith.constant 0 : i32
    return %arg0, %arg1, %c0_i32, %c0_i32_0 : i32, i32, i32, i32
  }
  func.func @transform_1(%arg0: i32, %arg1: i32, %arg2: i32) -> (i32, i32, i32, i32) {
    %c0_i32 = arith.constant 0 : i32
    %c0_i32_0 = arith.constant 0 : i32
    %c0_i32_1 = arith.constant 0 : i32
    return %arg0, %arg1, %c0_i32, %c0_i32_0 : i32, i32, i32, i32
  }
  func.func @transform_2(%arg0: i32, %arg1: i32, %arg2: i32) -> (i32, i32, i32, i32) {
    %c0_i32 = arith.constant 0 : i32
    %c0_i32_0 = arith.constant 0 : i32
    return %arg0, %arg1, %arg2, %c0_i32 : i32, i32, i32, i32
  }
  func.func @transform_3(%arg0: i32, %arg1: i32, %arg2: i32) -> (i32, i32, i32, i32) {
    %c0_i32 = arith.constant 0 : i32
    %c0_i32_0 = arith.constant 0 : i32
    return %arg0, %arg1, %arg2, %c0_i32 : i32, i32, i32, i32
  }
}

</mosaic_0001>

<llo_original>
// kernel: film_1d.1
$region0: #{film_1d.1}
  #allocation0 [shape = 'u32[]', space=smem, size = 0x4, offset = 0x4, fixed_abs, tag = 'smem constant byte address 0x4 - core index']
  #allocation1 [shape = 'u32[144,128]{1,0:T(1,128)}', space=vmem, size = 0x12000, scoped, tag = 'internal scratch']
  %s0 = inlined_call_operand.vmem [shape: f32[2,8,1,128], index: 0, kind: input, shape index: {}]
  %s1 = inlined_call_operand.vmem [shape: f32[2,8,1,128], index: 1, kind: input, shape index: {}]
  %s2 = inlined_call_operand.vmem [shape: f32[2,8,2,128], index: 2, kind: input, shape index: {}]
  %s3 = inlined_call_operand.vmem [shape: f32[2,8,2,128], index: 3, kind: output, shape index: {}]
  %s4 = sld [smem:[#allocation0]]
  $region45: #{film_1d.1} parent=0
    _
  %s6 = ssub.s32 1, %s4
  %s7 = scalar_select 0, %s6, %s4
  loop: start=0, step=1, limit=4
  $region2: #{film_1d.1} parent=0 // loop_pre_header
    _
  $region3: #{film_1d.1} parent=0 // loop_header
    %s9 = sphi 0, %s13
    %p10 = scmp.ge.s32.totalorder %s9, 4
    %s16 = sphi 0, %s35
    %s17 = sphi 0, %s31
    %s18 = sphi 0, %s27
    %s19 = sphi 0, %s16
    %s20 = sphi 0, %s17
    %s21 = sphi 0, %s18
    %s22 = sphi 0, %s19
    %s23 = sphi 0, %s20
    %s24 = sphi 0, %s21
    %s40 = sphi 0, %s42
    %s43 = sphi 0, %s40
    %s44 = sphi 0, %s43
    %s60 = sphi 0, %s44
    %s68 = sphi 0, %s70
    %s71 = sphi 0, %s68
    %s72 = sphi 0, %s71
    %s88 = sphi 0, %s72
    %s98 = sphi 0, %s100
    %s101 = sphi 0, %s98
    %s102 = sphi 0, %s101
    %s118 = sphi 0, %s102
    %s128 = sphi 0, %s130
    %s131 = sphi 0, %s128
    %s132 = sphi 0, %s131
    %s148 = sphi 0, %s132
  $region4: #{film_1d.1} parent=0 // loop_header_branch
    %12 = sbr.rel (%p10) target = $region8
  $region5: #{film_1d.1} parent=0 // loop_body
    %s14 = ssub.s32 %s9, 1
    %s15 = ssub.s32 %s9, 2
    %s25 = sadd.s32 1, %s18
    %p26 = scmp.ge.s32.totalorder %s25, 1
    %s27 = scalar_select %p26, 0, %s25
    %s28 = sadd.s32 1, %s17
    %s29 = scalar_select %p26, %s28, %s17
    %p30 = scmp.ge.s32.totalorder %s29, 1
    %s31 = scalar_select %p30, 0, %s29
    %s32 = sadd.s32 1, %s16
    %s33 = scalar_select %p30, %s32, %s16
    %p34 = scmp.ge.s32.totalorder %s33, 2
    %s35 = scalar_select %p34, 0, %s33
    %s36 = ssub.s32 %s16, %s35
    %s37 = ssub.s32 %s17, %s31
    %s38 = sor.u32 %s36, %s37
    %p39 = scmp.eq.s32.totalorder %s38, 0
    %s41 = sadd.s32 %s40, 1
    %s42 = scalar_select %p39, %s40, %s41
    %p45 = pneg %p39
    %p46 = scmp.eq.s32.totalorder %s9, 1
    %p47 = por %p45, %p46
    %p48 = scmp.ne.s32.totalorder %s40, %s43
    %p49 = scmp.eq.s32.totalorder %s9, 0
    %p50 = por %p48, %p49
    %p51 = scmp.ne.s32.totalorder %s40, %s43
    %p52 = scmp.eq.s32.totalorder %s14, 1
    %p53 = por %p51, %p52
    %p54 = scmp.ne.s32.totalorder %s43, %s44
    %p55 = scmp.eq.s32.totalorder %s14, 0
    %p56 = por %p54, %p55
    %p57 = scmp.ne.s32.totalorder %s43, %s44
    %p58 = scmp.eq.s32.totalorder %s15, 1
    %p59 = por %p57, %p58
    %p61 = scmp.ne.s32.totalorder %s44, %s60
    %p62 = scmp.eq.s32.totalorder %s15, 0
    %p63 = por %p61, %p62
    %s64 = ssub.s32 %s16, %s35
    %s65 = ssub.s32 %s17, %s31
    %s66 = sor.u32 %s64, %s65
    %p67 = scmp.eq.s32.totalorder %s66, 0
    %s69 = sadd.s32 %s68, 1
    %s70 = scalar_select %p67, %s68, %s69
    %p73 = pneg %p67
    %p74 = scmp.eq.s32.totalorder %s9, 1
    %p75 = por %p73, %p74
    %p76 = scmp.ne.s32.totalorder %s68, %s71
    %p77 = scmp.eq.s32.totalorder %s9, 0
    %p78 = por %p76, %p77
    %p79 = scmp.ne.s32.totalorder %s68, %s71
    %p80 = scmp.eq.s32.totalorder %s14, 1
    %p81 = por %p79, %p80
    %p82 = scmp.ne.s32.totalorder %s71, %s72
    %p83 = scmp.eq.s32.totalorder %s14, 0
    %p84 = por %p82, %p83
    %p85 = scmp.ne.s32.totalorder %s71, %s72
    %p86 = scmp.eq.s32.totalorder %s15, 1
    %p87 = por %p85, %p86
    %p89 = scmp.ne.s32.totalorder %s72, %s88
    %p90 = scmp.eq.s32.totalorder %s15, 0
    %p91 = por %p89, %p90
    %s92 = ssub.s32 %s16, %s35
    %s93 = ssub.s32 %s17, %s31
    %s94 = sor.u32 %s92, %s93
    %s95 = ssub.s32 %s18, %s27
    %s96 = sor.u32 %s94, %s95
    %p97 = scmp.eq.s32.totalorder %s96, 0
    %s99 = sadd.s32 %s98, 1
    %s100 = scalar_select %p97, %s98, %s99
    %p103 = pneg %p97
    %p104 = scmp.eq.s32.totalorder %s9, 1
    %p105 = por %p103, %p104
    %p106 = scmp.ne.s32.totalorder %s98, %s101
    %p107 = scmp.eq.s32.totalorder %s9, 0
    %p108 = por %p106, %p107
    %p109 = scmp.ne.s32.totalorder %s98, %s101
    %p110 = scmp.eq.s32.totalorder %s14, 1
    %p111 = por %p109, %p110
    %p112 = scmp.ne.s32.totalorder %s101, %s102
    %p113 = scmp.eq.s32.totalorder %s14, 0
    %p114 = por %p112, %p113
    %p115 = scmp.ne.s32.totalorder %s101, %s102
    %p116 = scmp.eq.s32.totalorder %s15, 1
    %p117 = por %p115, %p116
    %p119 = scmp.ne.s32.totalorder %s102, %s118
    %p120 = scmp.eq.s32.totalorder %s15, 0
    %p121 = por %p119, %p120
    %s122 = ssub.s32 %s16, %s35
    %s123 = ssub.s32 %s17, %s31
    %s124 = sor.u32 %s122, %s123
    %s125 = ssub.s32 %s18, %s27
    %s126 = sor.u32 %s124, %s125
    %p127 = scmp.eq.s32.totalorder %s126, 0
    %s129 = sadd.s32 %s128, 1
    %s130 = scalar_select %p127, %s128, %s129
    %p133 = pneg %p127
    %p134 = scmp.eq.s32.totalorder %s9, 1
    %p135 = por %p133, %p134
    %p136 = scmp.ne.s32.totalorder %s128, %s131
    %p137 = scmp.eq.s32.totalorder %s9, 0
    %p138 = por %p136, %p137
    %p139 = scmp.ne.s32.totalorder %s128, %s131
    %p140 = scmp.eq.s32.totalorder %s14, 1
    %p141 = por %p139, %p140
    %p142 = scmp.ne.s32.totalorder %s131, %s132
    %p143 = scmp.eq.s32.totalorder %s14, 0
    %p144 = por %p142, %p143
    %p145 = scmp.ne.s32.totalorder %s131, %s132
    %p146 = scmp.eq.s32.totalorder %s15, 1
    %p147 = por %p145, %p146
    %p149 = scmp.ne.s32.totalorder %s132, %s148
    %p150 = scmp.eq.s32.totalorder %s15, 0
    %p151 = por %p149, %p150
    %p152 = scmp.le.s32.totalorder 1, %s9
    %p153 = scmp.lt.s32.totalorder %s9, 3
    %p154 = pnand %p152, %p153
    %p155 = pneg %p154
    // Predicated region
    $region9: #{film_1d.1} parent=5 // pred_check
      _
    $region10: #{film_1d.1} parent=5 // pred_check_branch
      %157 = sbr.rel (%p154) target = $region12
    $region11: #{film_1d.1} parent=5 // pred_region
      %s158 = ssub.s32 %s9, 1
    $region12: #{film_1d.1} parent=5 // pred_fallthru
      _
    %p159 = scmp.lt.s32.totalorder %s9, 2
    // Predicated region
    $region13: #{film_1d.1} parent=5 // pred_check
      %p160 = pneg %p159
    $region14: #{film_1d.1} parent=5 // pred_check_branch
      %162 = sbr.rel (%p160) target = $region16
    $region15: #{film_1d.1} parent=5 // pred_region
      // Predicated region
      $region17: #{film_1d.1} parent=15 // pred_check
        %p163 = pneg %p50
      $region18: #{film_1d.1} parent=15 // pred_check_branch
        %165 = sbr.rel (%p163) target = $region20
      $region19: #{film_1d.1} parent=15 // pred_region
        %s166 = smul.u32 8, %s17
        %p167 = scmp.lt.s32.totalorder %s16, 1
        %s168 = scalar_select %p167, %s16, 1
        %p169 = scmp.lt.s32.totalorder %s166, 7
        %s170 = scalar_select %p169, %s166, 7
        %s171 = smul.addr %s168, 8
        %s172 = sadd.s32 %s170, %s171
        %s173 = scalar_lea.vmem %s0, %s172
        %s174 = smul.u32 8, %s17
      $region20: #{film_1d.1} parent=15 // pred_fallthru
        _
      // Predicated region
      $region21: #{film_1d.1} parent=15 // pred_check
        %p175 = pneg %p78
      $region22: #{film_1d.1} parent=15 // pred_check_branch
        %177 = sbr.rel (%p175) target = $region24
      $region23: #{film_1d.1} parent=15 // pred_region
        %s178 = smul.u32 8, %s17
        %p179 = scmp.lt.s32.totalorder %s16, 1
        %s180 = scalar_select %p179, %s16, 1
        %p181 = scmp.lt.s32.totalorder %s178, 7
        %s182 = scalar_select %p181, %s178, 7
        %s183 = smul.addr %s180, 8
        %s184 = sadd.s32 %s182, %s183
        %s185 = scalar_lea.vmem %s1, %s184
        %s186 = smul.u32 8, %s17
      $region24: #{film_1d.1} parent=15 // pred_fallthru
        _
      // Predicated region
      $region25: #{film_1d.1} parent=15 // pred_check
        %p187 = pneg %p108
      $region26: #{film_1d.1} parent=15 // pred_check_branch
        %189 = sbr.rel (%p187) target = $region28
      $region27: #{film_1d.1} parent=15 // pred_region
        %s190 = smul.u32 8, %s17
        %p191 = scmp.lt.s32.totalorder %s16, 1
        %s192 = scalar_select %p191, %s16, 1
        %p193 = scmp.lt.s32.totalorder %s190, 7
        %s194 = scalar_select %p193, %s190, 7
        %p195 = scmp.lt.s32.totalorder %s18, 0
        %s196 = scalar_select %p195, %s18, 0
        %s197 = sadd.s32 %s196, %s194
        %s198 = smul.addr %s192, 8
        %s199 = sadd.s32 %s197, %s198
        %s200 = smul.addr %s199, 2
        %s201 = scalar_lea.vmem %s2, %s200
        %s202 = smul.u32 8, %s17
      $region28: #{film_1d.1} parent=15 // pred_fallthru
        _
    $region16: #{film_1d.1} parent=5 // pred_fallthru
      _
    %p203 = scmp.le.s32.totalorder 1, %s9
    %p204 = scmp.lt.s32.totalorder %s9, 3
    %p205 = pnand %p203, %p204
    %p206 = pneg %p205
    // Predicated region
    $region29: #{film_1d.1} parent=5 // pred_check
      _
    $region30: #{film_1d.1} parent=5 // pred_check_branch
      %208 = sbr.rel (%p205) target = $region32
    $region31: #{film_1d.1} parent=5 // pred_region
      %s209 = ssub.s32 %s9, 1
      %s210 = smul.u32 8, %s20
      %p211 = scmp.lt.s32.totalorder %s19, 1
      %s212 = scalar_select %p211, %s19, 1
      %p213 = scmp.lt.s32.totalorder %s210, 7
      %s214 = scalar_select %p213, %s210, 7
      %s215 = smul.addr %s212, 8
      %s216 = sadd.s32 %s214, %s215
      %s217 = scalar_lea.vmem %s0, %s216
      %p218 = pneg %p56
      %p219 = pneg %p53
      %s220 = smul.u32 8, %s20
      %p221 = scmp.lt.s32.totalorder %s19, 1
      %s222 = scalar_select %p221, %s19, 1
      %p223 = scmp.lt.s32.totalorder %s220, 7
      %s224 = scalar_select %p223, %s220, 7
      %s225 = smul.addr %s222, 8
      %s226 = sadd.s32 %s224, %s225
      %s227 = scalar_lea.vmem %s1, %s226
      %p228 = pneg %p84
      %p229 = pneg %p81
      %s230 = smul.u32 8, %s20
      %p231 = scmp.lt.s32.totalorder %s19, 1
      %s232 = scalar_select %p231, %s19, 1
      %p233 = scmp.lt.s32.totalorder %s230, 7
      %s234 = scalar_select %p233, %s230, 7
      %p235 = scmp.lt.s32.totalorder %s21, 0
      %s236 = scalar_select %p235, %s21, 0
      %s237 = sadd.s32 %s236, %s234
      %s238 = smul.addr %s232, 8
      %s239 = sadd.s32 %s237, %s238
      %s240 = smul.addr %s239, 2
      %s241 = scalar_lea.vmem %s2, %s240
      %p242 = pneg %p114
      %p243 = pneg %p111
      %p244 = pneg %p144
      %p245 = pneg %p141
      %s246 = smul.u32 8, %s20
      %p247 = scmp.lt.s32.totalorder %s19, 1
      %s248 = scalar_select %p247, %s19, 1
      %p249 = scmp.lt.s32.totalorder %s246, 7
      %s250 = scalar_select %p249, %s246, 7
      %p251 = scmp.lt.s32.totalorder %s21, 0
      %s252 = scalar_select %p251, %s21, 0
      %s253 = sadd.s32 %s252, %s250
      %s254 = smul.addr %s248, 8
      %s255 = sadd.s32 %s253, %s254
      %s256 = smul.addr %s255, 2
      %s257 = scalar_lea.vmem %s3, %s256
      %s258 = smul.u32 8, %s20
      %p259 = scmp.lt.s32.totalorder %s19, 1
      %s260 = scalar_select %p259, %s19, 1
      %p261 = scmp.lt.s32.totalorder %s258, 7
      %s262 = scalar_select %p261, %s258, 7
      %s263 = smul.addr %s260, 8
      %s264 = sadd.s32 %s262, %s263
      %s265 = scalar_lea.vmem %s0, %s264
      %s266 = smul.u32 8, %s20
      %s267 = smul.u32 8, %s20
      %p268 = scmp.lt.s32.totalorder %s19, 1
      %s269 = scalar_select %p268, %s19, 1
      %p270 = scmp.lt.s32.totalorder %s267, 7
      %s271 = scalar_select %p270, %s267, 7
      %s272 = smul.addr %s269, 8
      %s273 = sadd.s32 %s271, %s272
      %s274 = scalar_lea.vmem %s1, %s273
      %s275 = smul.u32 8, %s20
      %s276 = smul.u32 8, %s20
      %p277 = scmp.lt.s32.totalorder %s19, 1
      %s278 = scalar_select %p277, %s19, 1
      %p279 = scmp.lt.s32.totalorder %s276, 7
      %s280 = scalar_select %p279, %s276, 7
      %p281 = scmp.lt.s32.totalorder %s21, 0
      %s282 = scalar_select %p281, %s21, 0
      %s283 = sadd.s32 %s282, %s280
      %s284 = smul.addr %s278, 8
      %s285 = sadd.s32 %s283, %s284
      %s286 = smul.addr %s285, 2
      %s287 = scalar_lea.vmem %s2, %s286
      %s288 = smul.u32 8, %s20
      %s289 = smul.u32 8, %s20
      %p290 = scmp.lt.s32.totalorder %s19, 1
      %s291 = scalar_select %p290, %s19, 1
      %p292 = scmp.lt.s32.totalorder %s289, 7
      %s293 = scalar_select %p292, %s289, 7
      %p294 = scmp.lt.s32.totalorder %s21, 0
      %s295 = scalar_select %p294, %s21, 0
      %s296 = sadd.s32 %s295, %s293
      %s297 = smul.addr %s291, 8
      %s298 = sadd.s32 %s296, %s297
      %s299 = smul.addr %s298, 2
      %s300 = scalar_lea.vmem %s3, %s299
      %s301 = smul.u32 8, %s20
      %v302 = vld [vmem:[%s287] sm:$0x3]
      %v303 = vld [vmem:[%s287 + $0x2] sm:$0x3]
      %v304 = vld [vmem:[%s287 + $0x4] sm:$0x3]
      %v305 = vld [vmem:[%s287 + $0x6] sm:$0x3]
      %v306 = vld [vmem:[%s287 + $0x8] sm:$0x3]
      %v307 = vld [vmem:[%s287 + $0xa] sm:$0x3]
      %v308 = vld [vmem:[%s287 + $0xc] sm:$0x3]
      %v309 = vld [vmem:[%s287 + $0xe] sm:$0x3]
      %v310 = vld [vmem:[%s265] sm:$0x1]
      %v311 = vld [vmem:[%s265 + $0x1] sm:$0x1]
      %v312 = vld [vmem:[%s265 + $0x2] sm:$0x1]
      %v313 = vld [vmem:[%s265 + $0x3] sm:$0x1]
      %v314 = vld [vmem:[%s265 + $0x4] sm:$0x1]
      %v315 = vld [vmem:[%s265 + $0x5] sm:$0x1]
      %v316 = vld [vmem:[%s265 + $0x6] sm:$0x1]
      %v317 = vld [vmem:[%s265 + $0x7] sm:$0x1]
      %v326 = vlaneseq
      %v327 = vshrl.u32 %v326, 7
      %v328 = vsub.s32 0, %v327
      %v329 = vrot.slane %v310, %v328
      %v330 = vlaneseq
      %v331 = vshrl.u32 %v330, 7
      %v332 = vsub.s32 0, %v331
      %v333 = vrot.slane %v311, %v332
      %v334 = vlaneseq
      %v335 = vshrl.u32 %v334, 7
      %v336 = vsub.s32 0, %v335
      %v337 = vrot.slane %v312, %v336
      %v338 = vlaneseq
      %v339 = vshrl.u32 %v338, 7
      %v340 = vsub.s32 0, %v339
      %v341 = vrot.slane %v313, %v340
      %v342 = vlaneseq
      %v343 = vshrl.u32 %v342, 7
      %v344 = vsub.s32 0, %v343
      %v345 = vrot.slane %v314, %v344
      %v346 = vlaneseq
      %v347 = vshrl.u32 %v346, 7
      %v348 = vsub.s32 0, %v347
      %v349 = vrot.slane %v315, %v348
      %v350 = vlaneseq
      %v351 = vshrl.u32 %v350, 7
      %v352 = vsub.s32 0, %v351
      %v353 = vrot.slane %v316, %v352
      %v354 = vlaneseq
      %v355 = vshrl.u32 %v354, 7
      %v356 = vsub.s32 0, %v355
      %v357 = vrot.slane %v317, %v356
      %v366 = vmul.f32 %v302, %v329
      %v367 = vmul.f32 %v303, %v333
      %v368 = vmul.f32 %v304, %v337
      %v369 = vmul.f32 %v305, %v341
      %v370 = vmul.f32 %v306, %v345
      %v371 = vmul.f32 %v307, %v349
      %v372 = vmul.f32 %v308, %v353
      %v373 = vmul.f32 %v309, %v357
      %v374 = vld [vmem:[%s274] sm:$0x1]
      %v375 = vld [vmem:[%s274 + $0x1] sm:$0x1]
      %v376 = vld [vmem:[%s274 + $0x2] sm:$0x1]
      %v377 = vld [vmem:[%s274 + $0x3] sm:$0x1]
      %v378 = vld [vmem:[%s274 + $0x4] sm:$0x1]
      %v379 = vld [vmem:[%s274 + $0x5] sm:$0x1]
      %v380 = vld [vmem:[%s274 + $0x6] sm:$0x1]
      %v381 = vld [vmem:[%s274 + $0x7] sm:$0x1]
      %v390 = vlaneseq
      %v391 = vshrl.u32 %v390, 7
      %v392 = vsub.s32 0, %v391
      %v393 = vrot.slane %v374, %v392
      %v394 = vlaneseq
      %v395 = vshrl.u32 %v394, 7
      %v396 = vsub.s32 0, %v395
      %v397 = vrot.slane %v375, %v396
      %v398 = vlaneseq
      %v399 = vshrl.u32 %v398, 7
      %v400 = vsub.s32 0, %v399
      %v401 = vrot.slane %v376, %v400
      %v402 = vlaneseq
      %v403 = vshrl.u32 %v402, 7
      %v404 = vsub.s32 0, %v403
      %v405 = vrot.slane %v377, %v404
      %v406 = vlaneseq
      %v407 = vshrl.u32 %v406, 7
      %v408 = vsub.s32 0, %v407
      %v409 = vrot.slane %v378, %v408
      %v410 = vlaneseq
      %v411 = vshrl.u32 %v410, 7
      %v412 = vsub.s32 0, %v411
      %v413 = vrot.slane %v379, %v412
      %v414 = vlaneseq
      %v415 = vshrl.u32 %v414, 7
      %v416 = vsub.s32 0, %v415
      %v417 = vrot.slane %v380, %v416
      %v418 = vlaneseq
      %v419 = vshrl.u32 %v418, 7
      %v420 = vsub.s32 0, %v419
      %v421 = vrot.slane %v381, %v420
      %v430 = vadd.f32 %v366, %v393
      %v431 = vadd.f32 %v367, %v397
      %v432 = vadd.f32 %v368, %v401
      %v433 = vadd.f32 %v369, %v405
      %v434 = vadd.f32 %v370, %v409
      %v435 = vadd.f32 %v371, %v413
      %v436 = vadd.f32 %v372, %v417
      %v437 = vadd.f32 %v373, %v421
      %438 = vst [vmem:[%s300] sm:$0x3] %v430
      %439 = vst [vmem:[%s300 + $0x2] sm:$0x3] %v431
      %440 = vst [vmem:[%s300 + $0x4] sm:$0x3] %v432
      %441 = vst [vmem:[%s300 + $0x6] sm:$0x3] %v433
      %442 = vst [vmem:[%s300 + $0x8] sm:$0x3] %v434
      %443 = vst [vmem:[%s300 + $0xa] sm:$0x3] %v435
      %444 = vst [vmem:[%s300 + $0xc] sm:$0x3] %v436
      %445 = vst [vmem:[%s300 + $0xe] sm:$0x3] %v437
      %s446 = smul.u32 8, %s20
      %p447 = scmp.lt.s32.totalorder %s19, 1
      %s448 = scalar_select %p447, %s19, 1
      %p449 = scmp.lt.s32.totalorder %s446, 7
      %s450 = scalar_select %p449, %s446, 7
      %p451 = scmp.lt.s32.totalorder %s21, 0
      %s452 = scalar_select %p451, %s21, 0
      %s453 = sadd.s32 %s452, %s450
      %s454 = smul.addr %s448, 8
      %s455 = sadd.s32 %s453, %s454
      %s456 = smul.addr %s455, 2
      %s457 = scalar_lea.vmem %s3, %s456
      // Predicated region
      $region33: #{film_1d.1} parent=31 // pred_check
        %p458 = pneg %p141
      $region34: #{film_1d.1} parent=31 // pred_check_branch
        %460 = sbr.rel (%p458) target = $region36
      $region35: #{film_1d.1} parent=31 // pred_region
        %s461 = smul.u32 8, %s20
      $region36: #{film_1d.1} parent=31 // pred_fallthru
        _
    $region32: #{film_1d.1} parent=5 // pred_fallthru
      _
    %p462 = scmp.le.s32.totalorder 2, %s9
    // Predicated region
    $region37: #{film_1d.1} parent=5 // pred_check
      %p463 = pneg %p462
    $region38: #{film_1d.1} parent=5 // pred_check_branch
      %465 = sbr.rel (%p463) target = $region40
    $region39: #{film_1d.1} parent=5 // pred_region
      %s466 = ssub.s32 %s9, 2
      // Predicated region
      $region41: #{film_1d.1} parent=39 // pred_check
        %p467 = pneg %p147
      $region42: #{film_1d.1} parent=39 // pred_check_branch
        %469 = sbr.rel (%p467) target = $region44
      $region43: #{film_1d.1} parent=39 // pred_region
        %s470 = smul.u32 8, %s23
        %p471 = scmp.lt.s32.totalorder %s22, 1
        %s472 = scalar_select %p471, %s22, 1
        %p473 = scmp.lt.s32.totalorder %s470, 7
        %s474 = scalar_select %p473, %s470, 7
        %p475 = scmp.lt.s32.totalorder %s24, 0
        %s476 = scalar_select %p475, %s24, 0
        %s477 = sadd.s32 %s476, %s474
        %s478 = smul.addr %s472, 8
        %s479 = sadd.s32 %s477, %s478
        %s480 = smul.addr %s479, 2
        %s481 = scalar_lea.vmem %s3, %s480
      $region44: #{film_1d.1} parent=39 // pred_fallthru
        _
    $region40: #{film_1d.1} parent=5 // pred_fallthru
      _
  $region6: #{film_1d.1} parent=0 // loop_footer
    %s13 = sadd.s32 1, %s9
  $region7: #{film_1d.1} parent=0 // loop_footer_branch
    %8 = sbr.rel target = $region3
  $region8: #{film_1d.1} parent=0 // loop_exit
    _

</llo_original>
